<compile_context>
chip_gen: v6e
topology: v6e:2x2x1
jax: 0.10.0
libtpu: 0.0.40
codegen_flags: <defaults>
</compile_context>

<pallas_src>
import jax
import jax.numpy as jnp
from jax.experimental import pallas as pl
from jax.experimental.pallas import tpu as pltpu

_SUBLANES = 8


def _round_up(x, m):
    return (x + m - 1) // m * m


# ---------------------------------------------------------------------------
# Kernel
# ---------------------------------------------------------------------------
def _concat_mlp_kernel(hp_ref, hg_ref, w1a_ref, w1b_ref, b1_ref, w2_ref, b2_ref, o_ref):
    """One batch tile of: concat -> Linear -> ReLU -> Linear -> ReLU (eval Dropout=id)."""
    cd = w1a_ref.dtype                      # MXU input dtype (f32 or bf16)
    hp = hp_ref[...]
    hg = hg_ref[...]
    if hp.dtype != cd:                      # trace-time check: no cast if dtypes match
        hp = hp.astype(cd)
    if hg.dtype != cd:
        hg = hg.astype(cd)

    # concat([hp, hg], -1) @ W1  ==  hp @ W1[:D] + hg @ W1[D:]   (no concat/relayout)
    z1 = jnp.dot(hp, w1a_ref[...], preferred_element_type=jnp.float32)
    z1 = z1 + jnp.dot(hg, w1b_ref[...], preferred_element_type=jnp.float32)
    z1 = jnp.maximum(z1 + b1_ref[...], 0.0)            # bias + ReLU in f32 (VPU)
    # Dropout(p): identity in eval mode.

    z2 = jnp.dot(z1.astype(w2_ref.dtype), w2_ref[...],
                 preferred_element_type=jnp.float32)
    z2 = jnp.maximum(z2 + b2_ref[...], 0.0)
    o_ref[...] = z2.astype(o_ref.dtype)                 # unpadded (B, F) store


# ---------------------------------------------------------------------------
# Wrapper (parameter setup + pallas_call glue)
# ---------------------------------------------------------------------------
class FusionNetPallas:
    """Pallas-TPU port of FusionNet.forward (eval mode)."""

    def __init__(self, mode="simple_concat", params=None, key=None,
                 compute_dtype=jnp.float32, out_dtype=jnp.float32,
                 batch_tile=4096, min_pallas_batch=128):
        params = params or {}
        self.mode = mode
        self.input_embed_dim = int(params["embedding_coattn_dim"])
        self.fusion_mediate_embed_dim = int(params["fusion_mediate_embed_dim"])
        self.fusion_dropout_rate = float(params["fusion_dropout_rate"])
        self.embedding_final = int(params["embedding_final"])
        self.compute_dtype = compute_dtype
        self.out_dtype = out_dtype
        self.batch_tile = int(batch_tile)
        self.min_pallas_batch = int(min_pallas_batch)

        if self.mode == "concat_mlp":
            key = key if key is not None else jax.random.PRNGKey(0)
            k1, k2, k3, k4 = jax.random.split(key, 4)
            D = self.input_embed_dim
            d_in, d_mid, d_out = 2 * D, self.fusion_mediate_embed_dim, self.embedding_final
            lim1 = 1.0 / float(d_in) ** 0.5
            lim2 = 1.0 / float(d_mid) ** 0.5
            # Stored as [in, out] so the kernel does x @ W (== torch's x @ W.T).
            w1 = jax.random.uniform(k1, (d_in, d_mid), jnp.float32, -lim1, lim1)
            b1 = jax.random.uniform(k2, (1, d_mid), jnp.float32, -lim1, lim1)
            w2 = jax.random.uniform(k3, (d_mid, d_out), jnp.float32, -lim2, lim2)
            b2 = jax.random.uniform(k4, (1, d_out), jnp.float32, -lim2, lim2)

            # f32 masters (pure-JAX reference + small-batch fallback path).
            self.w1_f32, self.b1_f32, self.w2_f32, self.b2_f32 = w1, b1, w2, b2

            # Pre-split W1 (removes the in-kernel concat entirely).
            self.w1a = w1[:D].astype(compute_dtype)
            self.w1b = w1[D:].astype(compute_dtype)
            self.b1 = b1                                  # VPU work stays f32
            self.w2 = w2.astype(compute_dtype)            # unpadded (M, F)
            self.b2 = b2                                  # unpadded (1, F), f32

    # -- tiling ------------------------------------------------------------
    def _pick_tile(self, B):
        if B <= 2 * _SUBLANES:
            return B
        # Keep >= 2 tiles for sizeable B so v7x's two TensorCores both get work;
        # otherwise use the biggest tile (amortizes ~0.35us per grid step).
        tb = min(self.batch_tile, _round_up(pl.cdiv(B, 2), _SUBLANES))
        return min(tb, B)

    # -- plain-JAX fallback (small batches / reference math) ----------------
    def _forward_jax(self, hp, hg):
        h_mix = jnp.concatenate([hp, hg], axis=-1).astype(jnp.float32)
        h_mix = jnp.maximum(h_mix @ self.w1_f32 + self.b1_f32, 0.0)
        h_mix = jnp.maximum(h_mix @ self.w2_f32 + self.b2_f32, 0.0)
        return h_mix.astype(self.out_dtype)

    # -- forward -----------------------------------------------------------
    def __call__(self, h_patho_mil, h_gene_mil, force_pallas=False):
        B, D = h_patho_mil.shape
        assert D == self.input_embed_dim

        if self.mode != "concat_mlp":
            # simple_concat: pure layout op; native XLA concat is strictly better
            # than a standalone pallas_call (nothing to fuse, only launch overhead).
            return jnp.concatenate([h_patho_mil, h_gene_mil], axis=-1)

        if B < self.min_pallas_batch and not force_pallas:
            # Tiny problem: let XLA fuse it with producers/consumers instead of
            # paying fixed pallas_call launch + per-step overhead.
            return self._forward_jax(h_patho_mil, h_gene_mil)

        M, F = self.fusion_mediate_embed_dim, self.embedding_final
        tb = self._pick_tile(B)
        grid = (pl.cdiv(B, tb),)

        def tiled(last):
            return pl.BlockSpec((tb, last), lambda i: (i, 0))

        def resident(shape):
            # Constant index_map -> weight is DMA'd once and stays resident in
            # VMEM across every batch tile of the grid.
            return pl.BlockSpec(shape, lambda i: (0, 0))

        itemsize = lambda a: a.size * a.dtype.itemsize
        bytes_accessed = (
            itemsize(h_patho_mil) + itemsize(h_gene_mil)
            + itemsize(self.w1a) + itemsize(self.w1b) + itemsize(self.b1)
            + itemsize(self.w2) + itemsize(self.b2)
            + B * F * jnp.dtype(self.out_dtype).itemsize
        )
        cost = pl.CostEstimate(
            flops=2 * B * (2 * D * M + M * F),
            transcendentals=0,
            bytes_accessed=bytes_accessed,
        )

        return pl.pallas_call(
            _concat_mlp_kernel,
            out_shape=jax.ShapeDtypeStruct((B, F), self.out_dtype),
            grid=grid,
            in_specs=[
                tiled(D),               # h_patho tile
                tiled(D),               # h_gene tile
                resident((D, M)),       # w1a
                resident((D, M)),       # w1b
                resident((1, M)),       # b1 (f32)
                resident((M, F)),       # w2 (unpadded)
                resident((1, F)),       # b2 (unpadded, f32)
            ],
            out_specs=tiled(F),         # F == full last dim -> legal block shape
            compiler_params=pltpu.CompilerParams(dimension_semantics=("parallel",)),
            cost_estimate=cost,
        )(h_patho_mil, h_gene_mil, self.w1a, self.w1b, self.b1, self.w2, self.b2)


# ---------------------------------------------------------------------------
# Reference (plain JAX, f32 masters) for correctness checks
# ---------------------------------------------------------------------------
def _reference(net, hp, hg):
    h_mix = jnp.concatenate([hp.astype(jnp.float32), hg.astype(jnp.float32)], axis=-1)
    if net.mode == "concat_mlp":
        h_mix = jnp.maximum(h_mix @ net.w1_f32 + net.b1_f32, 0.0)
        h_mix = jnp.maximum(h_mix @ net.w2_f32 + net.b2_f32, 0.0)
    return h_mix


if __name__ == "__main__":
    key = jax.random.PRNGKey(0)
    k_hp, k_hg, k_params, k_big = jax.random.split(key, 4)

    params = dict(
        embedding_coattn_dim=32,
        fusion_mediate_embed_dim=64,
        fusion_dropout_rate=0.25,
        embedding_final=32,
    )
    B, D = 2, params["embedding_coattn_dim"]
    F = params["embedding_final"]
    h_patho = jax.random.normal(k_hp, (B, D), dtype=jnp.float32)
    h_gene = jax.random.normal(k_hg, (B, D), dtype=jnp.float32)

    net = FusionNetPallas(mode="concat_mlp", params=params, key=k_params)
    ref_small = _reference(net, h_patho, h_gene)

    # --- concat_mlp, tiny batch: default dispatch takes the fused-JAX fallback ---
    out_fb = jax.block_until_ready(net(h_patho, h_gene))
    assert out_fb.shape == (B, F)
    assert jnp.allclose(out_fb, ref_small, atol=1e-4, rtol=1e-4)

    # --- concat_mlp, tiny batch forced through the Pallas kernel (grid of 1) ---
    out_small = jax.block_until_ready(net(h_patho, h_gene, force_pallas=True))
    assert out_small.shape == (B, F)
    assert jnp.allclose(out_small, ref_small, atol=1e-4, rtol=1e-4)

    # --- concat_mlp, larger batches: batch grid (>=2 tiles) + partial last tile ---
    for Bb in (600, 601):   # 601: remainder not a multiple of 8
        hp_b = jax.random.normal(jax.random.fold_in(k_big, 2 * Bb), (Bb, D), jnp.float32)
        hg_b = jax.random.normal(jax.random.fold_in(k_big, 2 * Bb + 1), (Bb, D), jnp.float32)
        out_b = jax.block_until_ready(net(hp_b, hg_b))
        ref_b = _reference(net, hp_b, hg_b)
        assert out_b.shape == (Bb, F)
        assert jnp.allclose(out_b, ref_b, atol=1e-4, rtol=1e-4)

    # --- concat_mlp, bf16 end-to-end: bf16 inputs/weights/output, f32 accumulate ---
    net_bf16 = FusionNetPallas(mode="concat_mlp", params=params, key=k_params,
                               compute_dtype=jnp.bfloat16, out_dtype=jnp.bfloat16)
    Bb = 601
    hp_b16 = jax.random.normal(jax.random.fold_in(k_big, 100), (Bb, D)).astype(jnp.bfloat16)
    hg_b16 = jax.random.normal(jax.random.fold_in(k_big, 101), (Bb, D)).astype(jnp.bfloat16)
    out_b16 = jax.block_until_ready(net_bf16(hp_b16, hg_b16))
    ref_b16 = _reference(net_bf16, hp_b16, hg_b16)
    assert out_b16.shape == (Bb, F)
    assert out_b16.dtype == jnp.bfloat16
    assert bool(jnp.all(jnp.isfinite(out_b16.astype(jnp.float32))))
    assert jnp.allclose(out_b16.astype(jnp.float32), ref_b16, atol=7e-2, rtol=7e-2)

    # --- simple_concat (plain XLA concat; no Pallas kernel by design) ---
    net_sc = FusionNetPallas(mode="simple_concat", params=params)
    out_sc = jax.block_until_ready(net_sc(h_patho, h_gene))
    assert out_sc.shape == (B, 2 * D)
    assert jnp.allclose(out_sc, jnp.concatenate([h_patho, h_gene], axis=-1))

    print("KERNEL_OK")
</pallas_src>

<mosaic_0001>
module attributes {stable_mosaic.version = 11 : i64} {
  func.func @_concat_mlp_kernel(%arg0: i32, %arg1: memref<2x32xf32, #tpu.memory_space<vmem>>, %arg2: memref<2x32xf32, #tpu.memory_space<vmem>>, %arg3: memref<32x64xf32, #tpu.memory_space<vmem>>, %arg4: memref<32x64xf32, #tpu.memory_space<vmem>>, %arg5: memref<1x64xf32, #tpu.memory_space<vmem>>, %arg6: memref<64x32xf32, #tpu.memory_space<vmem>>, %arg7: memref<1x32xf32, #tpu.memory_space<vmem>>, %arg8: memref<2x32xf32, #tpu.memory_space<vmem>>) attributes {dimension_semantics = [#tpu.dimension_semantics<parallel>], iteration_bounds = array<i64: 1>, scalar_prefetch = 0 : i64, scratch_operands = 0 : i64, tpu.core_type = #tpu.core_type<tc>, window_params = [{transform_indices = @transform_0, window_bounds = array<i64: 2, 32>}, {transform_indices = @transform_1, window_bounds = array<i64: 2, 32>}, {pipeline_mode = #tpu.pipeline_mode<synchronous>, transform_indices = @transform_2, window_bounds = array<i64: 32, 64>}, {pipeline_mode = #tpu.pipeline_mode<synchronous>, transform_indices = @transform_3, window_bounds = array<i64: 32, 64>}, {pipeline_mode = #tpu.pipeline_mode<synchronous>, transform_indices = @transform_4, window_bounds = array<i64: 1, 64>}, {pipeline_mode = #tpu.pipeline_mode<synchronous>, transform_indices = @transform_5, window_bounds = array<i64: 64, 32>}, {pipeline_mode = #tpu.pipeline_mode<synchronous>, transform_indices = @transform_6, window_bounds = array<i64: 1, 32>}, {transform_indices = @transform_7, window_bounds = array<i64: 2, 32>}]} {
    %c0 = arith.constant 0 : index
    %c0_0 = arith.constant 0 : index
    %0 = vector.load %arg1[%c0, %c0_0] : memref<2x32xf32, #tpu.memory_space<vmem>>, vector<2x32xf32>
    %c0_1 = arith.constant 0 : index
    %c0_2 = arith.constant 0 : index
    %1 = vector.load %arg2[%c0_1, %c0_2] : memref<2x32xf32, #tpu.memory_space<vmem>>, vector<2x32xf32>
    %c0_3 = arith.constant 0 : index
    %c0_4 = arith.constant 0 : index
    %2 = vector.load %arg3[%c0_3, %c0_4] : memref<32x64xf32, #tpu.memory_space<vmem>>, vector<32x64xf32>
    %cst = arith.constant dense<0.000000e+00> : vector<2x64xf32>
    %3 = tpu.matmul %0, %2, %cst {dimension_numbers = #tpu.dot_dimension_numbers<[1], [0], [0], [1], [0, 0, 1, 1], [], []>} : vector<2x32xf32>, vector<32x64xf32>, vector<2x64xf32> -> vector<2x64xf32>
    %c0_5 = arith.constant 0 : index
    %c0_6 = arith.constant 0 : index
    %4 = vector.load %arg4[%c0_5, %c0_6] : memref<32x64xf32, #tpu.memory_space<vmem>>, vector<32x64xf32>
    %cst_7 = arith.constant dense<0.000000e+00> : vector<2x64xf32>
    %5 = tpu.matmul %1, %4, %cst_7 {dimension_numbers = #tpu.dot_dimension_numbers<[1], [0], [0], [1], [0, 0, 1, 1], [], []>} : vector<2x32xf32>, vector<32x64xf32>, vector<2x64xf32> -> vector<2x64xf32>
    %6 = arith.addf %3, %5 : vector<2x64xf32>
    %c0_8 = arith.constant 0 : index
    %c0_9 = arith.constant 0 : index
    %7 = vector.load %arg5[%c0_8, %c0_9] : memref<1x64xf32, #tpu.memory_space<vmem>>, vector<1x64xf32>
    %8 = vector.broadcast %7 : vector<1x64xf32> to vector<2x64xf32>
    %9 = arith.addf %6, %8 : vector<2x64xf32>
    %cst_10 = arith.constant 0.000000e+00 : f32
    %10 = vector.broadcast %cst_10 : f32 to vector<2x64xf32>
    %11 = arith.maximumf %9, %10 : vector<2x64xf32>
    %c0_11 = arith.constant 0 : index
    %c0_12 = arith.constant 0 : index
    %12 = vector.load %arg6[%c0_11, %c0_12] : memref<64x32xf32, #tpu.memory_space<vmem>>, vector<64x32xf32>
    %cst_13 = arith.constant dense<0.000000e+00> : vector<2x32xf32>
    %13 = tpu.matmul %11, %12, %cst_13 {dimension_numbers = #tpu.dot_dimension_numbers<[1], [0], [0], [1], [0, 0, 1, 1], [], []>} : vector<2x64xf32>, vector<64x32xf32>, vector<2x32xf32> -> vector<2x32xf32>
    %c0_14 = arith.constant 0 : index
    %c0_15 = arith.constant 0 : index
    %14 = vector.load %arg7[%c0_14, %c0_15] : memref<1x32xf32, #tpu.memory_space<vmem>>, vector<1x32xf32>
    %15 = vector.broadcast %14 : vector<1x32xf32> to vector<2x32xf32>
    %16 = arith.addf %13, %15 : vector<2x32xf32>
    %cst_16 = arith.constant 0.000000e+00 : f32
    %17 = vector.broadcast %cst_16 : f32 to vector<2x32xf32>
    %18 = arith.maximumf %16, %17 : vector<2x32xf32>
    %c0_17 = arith.constant 0 : index
    %c0_18 = arith.constant 0 : index
    %19 = vector.load %arg8[%c0_17, %c0_18] : memref<2x32xf32, #tpu.memory_space<vmem>>, vector<2x32xf32>
    tpu.vector_store %arg8[%c0_17, %c0_18], %18 {strides = array<i32>} : memref<2x32xf32, #tpu.memory_space<vmem>>, vector<2x32xf32>,
    return
  }
  func.func @transform_0(%arg0: i32) -> (i32, i32) {
    %c0_i32 = arith.constant 0 : i32
    %c0_i32_0 = arith.constant 0 : i32
    return %arg0, %c0_i32 : i32, i32
  }
  func.func @transform_1(%arg0: i32) -> (i32, i32) {
    %c0_i32 = arith.constant 0 : i32
    %c0_i32_0 = arith.constant 0 : i32
    return %arg0, %c0_i32 : i32, i32
  }
  func.func @transform_2(%arg0: i32) -> (i32, i32) {
    %c0_i32 = arith.constant 0 : i32
    %c0_i32_0 = arith.constant 0 : i32
    %c0_i32_1 = arith.constant 0 : i32
    return %c0_i32, %c0_i32_0 : i32, i32
  }
  func.func @transform_3(%arg0: i32) -> (i32, i32) {
    %c0_i32 = arith.constant 0 : i32
    %c0_i32_0 = arith.constant 0 : i32
    %c0_i32_1 = arith.constant 0 : i32
    return %c0_i32, %c0_i32_0 : i32, i32
  }
  func.func @transform_4(%arg0: i32) -> (i32, i32) {
    %c0_i32 = arith.constant 0 : i32
    %c0_i32_0 = arith.constant 0 : i32
    %c0_i32_1 = arith.constant 0 : i32
    return %c0_i32, %c0_i32_0 : i32, i32
  }
  func.func @transform_5(%arg0: i32) -> (i32, i32) {
    %c0_i32 = arith.constant 0 : i32
    %c0_i32_0 = arith.constant 0 : i32
    %c0_i32_1 = arith.constant 0 : i32
    return %c0_i32, %c0_i32_0 : i32, i32
  }
  func.func @transform_6(%arg0: i32) -> (i32, i32) {
    %c0_i32 = arith.constant 0 : i32
    %c0_i32_0 = arith.constant 0 : i32
    %c0_i32_1 = arith.constant 0 : i32
    return %c0_i32, %c0_i32_0 : i32, i32
  }
  func.func @transform_7(%arg0: i32) -> (i32, i32) {
    %c0_i32 = arith.constant 0 : i32
    %c0_i32_0 = arith.constant 0 : i32
    return %arg0, %c0_i32 : i32, i32
  }
}

</mosaic_0001>

<llo_original>
// kernel: tpu_custom_call.1
$region0: #{tpu_custom_call.1}
  #allocation0 [shape = 'u32[]', space=smem, size = 0x4, offset = 0x4, fixed_abs, tag = 'smem constant byte address 0x4 - core index']
  #allocation1 [shape = 'u32[144,128]{1,0:T(1,128)}', space=vmem, size = 0x12000, scoped, tag = 'internal scratch']
  %s0 = inlined_call_operand.vmem [shape: f32[2,32], index: 0, kind: input, shape index: {}]
  %s1 = inlined_call_operand.vmem [shape: f32[2,32], index: 1, kind: input, shape index: {}]
  %s2 = inlined_call_operand.vmem [shape: f32[32,64], index: 2, kind: input, shape index: {}]
  %s3 = inlined_call_operand.vmem [shape: f32[32,64], index: 3, kind: input, shape index: {}]
  %s4 = inlined_call_operand.vmem [shape: f32[1,64], index: 4, kind: input, shape index: {}]
  %s5 = inlined_call_operand.vmem [shape: f32[64,32], index: 5, kind: input, shape index: {}]
  %s6 = inlined_call_operand.vmem [shape: f32[1,32], index: 6, kind: input, shape index: {}]
  %s7 = inlined_call_operand.hbm [shape: f32[2,32], index: 7, kind: output, shape index: {}]
  %s8 = sld [smem:[#allocation0]]
  $region38: #{tpu_custom_call.1} parent=0
    _
  %s10 = ssub.s32 1, %s8
  %s11 = scalar_select 0, %s10, %s8
  $region1: #{tpu_custom_call.1} parent=0
    #allocation2 [shape = 'u8[1024]{0}', space=vmem, size = 0x400, scoped, tag = 'output window, operand 0, single buffered']
    #allocation3 [shape = 's32[1]{0}', space=sflag, size = 0x4, scoped, tag = 'scoped memory for tpu_custom_call.1']
    %12 = vsyncpa [#allocation3], 0
    // Predicated region
    $region2: #{tpu_custom_call.1} parent=1 // pred_check
      _
    $region3: #{tpu_custom_call.1} parent=1 // pred_check_branch
      %14 = sbr.rel (0) target = $region5
    $region4: #{tpu_custom_call.1} parent=1 // pred_region
      _
    $region5: #{tpu_custom_call.1} parent=1 // pred_fallthru
      _
    // Predicated region
    $region6: #{tpu_custom_call.1} parent=1 // pred_check
      _
    $region7: #{tpu_custom_call.1} parent=1 // pred_check_branch
      %16 = sbr.rel (0) target = $region9
    $region8: #{tpu_custom_call.1} parent=1 // pred_region
      _
    $region9: #{tpu_custom_call.1} parent=1 // pred_fallthru
      _
    // Predicated region
    $region10: #{tpu_custom_call.1} parent=1 // pred_check
      _
    $region11: #{tpu_custom_call.1} parent=1 // pred_check_branch
      %18 = sbr.rel (0) target = $region13
    $region12: #{tpu_custom_call.1} parent=1 // pred_region
      _
    $region13: #{tpu_custom_call.1} parent=1 // pred_fallthru
      _
    // Predicated region
    $region14: #{tpu_custom_call.1} parent=1 // pred_check
      _
    $region15: #{tpu_custom_call.1} parent=1 // pred_check_branch
      %20 = sbr.rel (0) target = $region17
    $region16: #{tpu_custom_call.1} parent=1 // pred_region
      _
    $region17: #{tpu_custom_call.1} parent=1 // pred_fallthru
      _
    // Predicated region
    $region18: #{tpu_custom_call.1} parent=1 // pred_check
      _
    $region19: #{tpu_custom_call.1} parent=1 // pred_check_branch
      %22 = sbr.rel (0) target = $region21
    $region20: #{tpu_custom_call.1} parent=1 // pred_region
      _
    $region21: #{tpu_custom_call.1} parent=1 // pred_fallthru
      _
    // Predicated region
    $region22: #{tpu_custom_call.1} parent=1 // pred_check
      _
    $region23: #{tpu_custom_call.1} parent=1 // pred_check_branch
      %24 = sbr.rel (0) target = $region25
    $region24: #{tpu_custom_call.1} parent=1 // pred_region
      _
    $region25: #{tpu_custom_call.1} parent=1 // pred_fallthru
      _
    // Predicated region
    $region26: #{tpu_custom_call.1} parent=1 // pred_check
      _
    $region27: #{tpu_custom_call.1} parent=1 // pred_check_branch
      %26 = sbr.rel (0) target = $region29
    $region28: #{tpu_custom_call.1} parent=1 // pred_region
      _
    $region29: #{tpu_custom_call.1} parent=1 // pred_fallthru
      _
    %v27 = vld [vmem:[%s0] sm:$0x3]
    %v28 = vld [vmem:[%s1] sm:$0x3]
    %v29 = vld [vmem:[%s2] sm:$0xff]
    %v30 = vld [vmem:[%s2 + $0x8] sm:$0xff]
    %v31 = vld [vmem:[%s2 + $0x10] sm:$0xff]
    %v32 = vld [vmem:[%s2 + $0x18] sm:$0xff]
    %v33 = vld [vmem:[%s3] sm:$0xff]
    %v34 = vld [vmem:[%s3 + $0x8] sm:$0xff]
    %v35 = vld [vmem:[%s3 + $0x10] sm:$0xff]
    %v36 = vld [vmem:[%s3 + $0x18] sm:$0xff]
    %vm37 = vcmask 261120
    %v39 = vsel %vm37, %v28, 0
    %41 = vmatprep.subr.mxu0 0.0
    %42 = vmatpush1.msra.mxu0 0.0
    %43 = vmatprep.subr.mxu0 0.0
    %44 = vmatpush1.msra.mxu0 0.0
    %45 = vmatprep.subr.mxu0 0.0
    %46 = vmatpush1.msra.mxu0 0.0
    %47 = vmatprep.subr.mxu0 0.0
    %48 = vmatpush1.msra.mxu0 0.0
    %49 = vmatprep.subr.mxu0 0.0
    %50 = vmatpush1.msra.mxu0 0.0
    %51 = vmatprep.subr.mxu0 0.0
    %52 = vmatpush1.msra.mxu0 0.0
    %53 = vmatprep.subr.mxu0 0.0
    %54 = vmatpush1.msra.mxu0 0.0
    %55 = vmatprep.subr.mxu0 0.0
    %56 = vmatpush1.msra.mxu0 0.0
    %57 = vmatprep.subr.mxu0 0.0
    %58 = vmatpush1.msra.mxu0 0.0
    %59 = vmatprep.subr.mxu0 0.0
    %60 = vmatpush1.msra.mxu0 0.0
    %61 = vmatprep.subr.mxu0 0.0
    %62 = vmatpush1.msra.mxu0 0.0
    %63 = vmatprep.subr.mxu0 0.0
    %64 = vmatpush1.msra.mxu0 0.0
    %65 = vmatprep.subr.mxu0 0.0
    %66 = vmatpush1.msra.mxu0 %v36
    %67 = vmatprep.subr.mxu0 0.0
    %68 = vmatpush1.msra.mxu0 %v35
    %69 = vmatprep.subr.mxu0 0.0
    %70 = vmatpush1.msra.mxu0 %v34
    %71 = vmatprep.subr.mxu0 0.0
    %72 = vmatpush1.msra.mxu0 %v33
    %73 = vmatprep.subr.mxu0 0.0
    %74 = vmatpush2.msra.mxu0 0.0
    %75 = vmatprep.subr.mxu0 0.0
    %76 = vmatpush2.msra.mxu0 0.0
    %77 = vmatprep.subr.mxu0 0.0
    %78 = vmatpush2.msra.mxu0 0.0
    %79 = vmatprep.subr.mxu0 0.0
    %80 = vmatpush2.msra.mxu0 0.0
    %81 = vmatprep.subr.mxu0 0.0
    %82 = vmatpush2.msra.mxu0 0.0
    %83 = vmatprep.subr.mxu0 0.0
    %84 = vmatpush2.msra.mxu0 0.0
    %85 = vmatprep.subr.mxu0 0.0
    %86 = vmatpush2.msra.mxu0 0.0
    %87 = vmatprep.subr.mxu0 0.0
    %88 = vmatpush2.msra.mxu0 0.0
    %89 = vmatprep.subr.mxu0 0.0
    %90 = vmatpush2.msra.mxu0 0.0
    %91 = vmatprep.subr.mxu0 0.0
    %92 = vmatpush2.msra.mxu0 0.0
    %93 = vmatprep.subr.mxu0 0.0
    %94 = vmatpush2.msra.mxu0 0.0
    %95 = vmatprep.subr.mxu0 0.0
    %96 = vmatpush2.msra.mxu0 0.0
    %97 = vmatprep.subr.mxu0 0.0
    %98 = vmatpush2.msra.mxu0 0.0
    %99 = vmatprep.subr.mxu0 0.0
    %100 = vmatpush2.msra.mxu0 0.0
    %101 = vmatprep.subr.mxu0 0.0
    %102 = vmatpush2.msra.mxu0 0.0
    %103 = vmatprep.subr.mxu0 0.0
    %104 = vmatpush2.msra.mxu0 0.0
    %105 = vmatprep.mubr.f32.mxu0 0.0
    %106 = vmatmul.mubr.f32.gmra.mxu0 %v39
    %v107 = vpop.f32.mrf.mxu0
    %v108 = vadd.f32 0.0, %v107
    %v109 = vpop.f32.mrf.mxu0
    %110 = vdwg.mxu0
    %v112 = vsel %vm37, %v27, 0
    %114 = vmatprep.subr.mxu0 0.0
    %115 = vmatpush1.msra.mxu0 0.0
    %116 = vmatprep.subr.mxu0 0.0
    %117 = vmatpush1.msra.mxu0 0.0
    %118 = vmatprep.subr.mxu0 0.0
    %119 = vmatpush1.msra.mxu0 0.0
    %120 = vmatprep.subr.mxu0 0.0
    %121 = vmatpush1.msra.mxu0 0.0
    %122 = vmatprep.subr.mxu0 0.0
    %123 = vmatpush1.msra.mxu0 0.0
    %124 = vmatprep.subr.mxu0 0.0
    %125 = vmatpush1.msra.mxu0 0.0
    %126 = vmatprep.subr.mxu0 0.0
    %127 = vmatpush1.msra.mxu0 0.0
    %128 = vmatprep.subr.mxu0 0.0
    %129 = vmatpush1.msra.mxu0 0.0
    %130 = vmatprep.subr.mxu0 0.0
    %131 = vmatpush1.msra.mxu0 0.0
    %132 = vmatprep.subr.mxu0 0.0
    %133 = vmatpush1.msra.mxu0 0.0
    %134 = vmatprep.subr.mxu0 0.0
    %135 = vmatpush1.msra.mxu0 0.0
    %136 = vmatprep.subr.mxu0 0.0
    %137 = vmatpush1.msra.mxu0 0.0
    %138 = vmatprep.subr.mxu0 0.0
    %139 = vmatpush1.msra.mxu0 %v32
    %140 = vmatprep.subr.mxu0 0.0
    %141 = vmatpush1.msra.mxu0 %v31
    %142 = vmatprep.subr.mxu0 0.0
    %143 = vmatpush1.msra.mxu0 %v30
    %144 = vmatprep.subr.mxu0 0.0
    %145 = vmatpush1.msra.mxu0 %v29
    %146 = vmatprep.subr.mxu0 0.0
    %147 = vmatpush2.msra.mxu0 0.0
    %148 = vmatprep.subr.mxu0 0.0
    %149 = vmatpush2.msra.mxu0 0.0
    %150 = vmatprep.subr.mxu0 0.0
    %151 = vmatpush2.msra.mxu0 0.0
    %152 = vmatprep.subr.mxu0 0.0
    %153 = vmatpush2.msra.mxu0 0.0
    %154 = vmatprep.subr.mxu0 0.0
    %155 = vmatpush2.msra.mxu0 0.0
    %156 = vmatprep.subr.mxu0 0.0
    %157 = vmatpush2.msra.mxu0 0.0
    %158 = vmatprep.subr.mxu0 0.0
    %159 = vmatpush2.msra.mxu0 0.0
    %160 = vmatprep.subr.mxu0 0.0
    %161 = vmatpush2.msra.mxu0 0.0
    %162 = vmatprep.subr.mxu0 0.0
    %163 = vmatpush2.msra.mxu0 0.0
    %164 = vmatprep.subr.mxu0 0.0
    %165 = vmatpush2.msra.mxu0 0.0
    %166 = vmatprep.subr.mxu0 0.0
    %167 = vmatpush2.msra.mxu0 0.0
    %168 = vmatprep.subr.mxu0 0.0
    %169 = vmatpush2.msra.mxu0 0.0
    %170 = vmatprep.subr.mxu0 0.0
    %171 = vmatpush2.msra.mxu0 0.0
    %172 = vmatprep.subr.mxu0 0.0
    %173 = vmatpush2.msra.mxu0 0.0
    %174 = vmatprep.subr.mxu0 0.0
    %175 = vmatpush2.msra.mxu0 0.0
    %176 = vmatprep.subr.mxu0 0.0
    %177 = vmatpush2.msra.mxu0 0.0
    %178 = vmatprep.mubr.f32.mxu0 0.0
    %179 = vmatmul.mubr.f32.gmra.mxu0 %v112
    %v180 = vpop.f32.mrf.mxu0
    %v181 = vadd.f32 %v108, %v180
    %v182 = vpop.f32.mrf.mxu0
    %183 = vdwg.mxu0
    %v184 = vld [vmem:[%s4] sm:$0x1]
    %v186 = vlaneseq
    %v187 = vshrl.u32 %v186, 7
    %v188 = vsub.s32 0, %v187
    %v189 = vrot.slane %v184, %v188
    %v191 = vadd.f32 %v181, %v189
    %v192 = vmax.f32 %v191, 0.0
    %v193 = vld [vmem:[%s5] sm:$0xff]
    %v194 = vld [vmem:[%s5 + $0x8] sm:$0xff]
    %v195 = vld [vmem:[%s5 + $0x10] sm:$0xff]
    %v196 = vld [vmem:[%s5 + $0x18] sm:$0xff]
    %v197 = vld [vmem:[%s5 + $0x20] sm:$0xff]
    %v198 = vld [vmem:[%s5 + $0x28] sm:$0xff]
    %v199 = vld [vmem:[%s5 + $0x30] sm:$0xff]
    %v200 = vld [vmem:[%s5 + $0x38] sm:$0xff]
    %v201 = vld [vmem:[%s6] sm:$0x1]
    %v203 = vlaneseq
    %v204 = vshrl.u32 %v203, 7
    %v205 = vsub.s32 0, %v204
    %v206 = vrot.slane %v201, %v205
    %vm208 = vcmask 523264
    %v210 = vsel %vm208, %v192, 0
    %212 = vmatprep.subr.mxu0 0.0
    %213 = vmatpush1.msra.mxu0 0.0
    %214 = vmatprep.subr.mxu0 0.0
    %215 = vmatpush1.msra.mxu0 0.0
    %216 = vmatprep.subr.mxu0 0.0
    %217 = vmatpush1.msra.mxu0 0.0
    %218 = vmatprep.subr.mxu0 0.0
    %219 = vmatpush1.msra.mxu0 0.0
    %220 = vmatprep.subr.mxu0 0.0
    %221 = vmatpush1.msra.mxu0 0.0
    %222 = vmatprep.subr.mxu0 0.0
    %223 = vmatpush1.msra.mxu0 0.0
    %224 = vmatprep.subr.mxu0 0.0
    %225 = vmatpush1.msra.mxu0 0.0
    %226 = vmatprep.subr.mxu0 0.0
    %227 = vmatpush1.msra.mxu0 0.0
    %228 = vmatprep.subr.mxu0 0.0
    %229 = vmatpush1.msra.mxu0 %v200
    %230 = vmatprep.subr.mxu0 0.0
    %231 = vmatpush1.msra.mxu0 %v199
    %232 = vmatprep.subr.mxu0 0.0
    %233 = vmatpush1.msra.mxu0 %v198
    %234 = vmatprep.subr.mxu0 0.0
    %235 = vmatpush1.msra.mxu0 %v197
    %236 = vmatprep.subr.mxu0 0.0
    %237 = vmatpush1.msra.mxu0 %v196
    %238 = vmatprep.subr.mxu0 0.0
    %239 = vmatpush1.msra.mxu0 %v195
    %240 = vmatprep.subr.mxu0 0.0
    %241 = vmatpush1.msra.mxu0 %v194
    %242 = vmatprep.subr.mxu0 0.0
    %243 = vmatpush1.msra.mxu0 %v193
    %244 = vmatprep.subr.mxu0 0.0
    %245 = vmatpush2.msra.mxu0 0.0
    %246 = vmatprep.subr.mxu0 0.0
    %247 = vmatpush2.msra.mxu0 0.0
    %248 = vmatprep.subr.mxu0 0.0
    %249 = vmatpush2.msra.mxu0 0.0
    %250 = vmatprep.subr.mxu0 0.0
    %251 = vmatpush2.msra.mxu0 0.0
    %252 = vmatprep.subr.mxu0 0.0
    %253 = vmatpush2.msra.mxu0 0.0
    %254 = vmatprep.subr.mxu0 0.0
    %255 = vmatpush2.msra.mxu0 0.0
    %256 = vmatprep.subr.mxu0 0.0
    %257 = vmatpush2.msra.mxu0 0.0
    %258 = vmatprep.subr.mxu0 0.0
    %259 = vmatpush2.msra.mxu0 0.0
    %260 = vmatprep.subr.mxu0 0.0
    %261 = vmatpush2.msra.mxu0 0.0
    %262 = vmatprep.subr.mxu0 0.0
    %263 = vmatpush2.msra.mxu0 0.0
    %264 = vmatprep.subr.mxu0 0.0
    %265 = vmatpush2.msra.mxu0 0.0
    %266 = vmatprep.subr.mxu0 0.0
    %267 = vmatpush2.msra.mxu0 0.0
    %268 = vmatprep.subr.mxu0 0.0
    %269 = vmatpush2.msra.mxu0 0.0
    %270 = vmatprep.subr.mxu0 0.0
    %271 = vmatpush2.msra.mxu0 0.0
    %272 = vmatprep.subr.mxu0 0.0
    %273 = vmatpush2.msra.mxu0 0.0
    %274 = vmatprep.subr.mxu0 0.0
    %275 = vmatpush2.msra.mxu0 0.0
    %276 = vmatprep.mubr.f32.mxu0 0.0
    %277 = vmatmul.mubr.f32.gmra.mxu0 %v210
    %v278 = vpop.f32.mrf.mxu0
    %v279 = vadd.f32 %v206, %v278
    %v280 = vpop.f32.mrf.mxu0
    %281 = vdwg.mxu0
    %v282 = vmax.f32 %v279, 0.0
    %vm283 = vcmask 254976
    %284 = vst.msk [vmem:[#allocation2] sm:$0x3] %vm283, %v282
    // Predicated region
    $region30: #{tpu_custom_call.1} parent=1 // pred_check
      _
    $region31: #{tpu_custom_call.1} parent=1 // pred_check_branch
      %286 = sbr.rel (0) target = $region33
    $region32: #{tpu_custom_call.1} parent=1 // pred_region
      %s288 = ssub.s32 32, 32
      %289 = vsyncadd [#allocation3], %s288
      %s291 = sshll.u32 [#allocation2], 4
      %s292 = int_to_ptr.vmem [resolvable:$true] %s291
      %294 = dma.vmem_to_hbm [thread:$0]  %s292, 32, %s7, [#allocation3]
    $region33: #{tpu_custom_call.1} parent=1 // pred_fallthru
      _
    // Predicated region
    $region34: #{tpu_custom_call.1} parent=1 // pred_check
      _
    $region35: #{tpu_custom_call.1} parent=1 // pred_check_branch
      %296 = sbr.rel (0) target = $region37
    $region36: #{tpu_custom_call.1} parent=1 // pred_region
      %297 = dma.done [#allocation3], 32
    $region37: #{tpu_custom_call.1} parent=1 // pred_fallthru
      _
    %298 = vsyncpa [#allocation3], 1

</llo_original>
